<compile_context>
chip_gen: v6e
topology: v6e:2x2x1
jax: 0.10.0
libtpu: 0.0.40
codegen_flags: <defaults>
</compile_context>

<pallas_src>
import jax
import jax.numpy as jnp
from jax.experimental import pallas as pl
from jax.experimental.pallas import tpu as pltpu


def _round_up(x, m):
    return ((x + m - 1) // m) * m


def _cdiv(a, b):
    return -(-a // b)


def _vmem_capacity_bytes():
    """Physical VMEM per TensorCore; conservative fallback if unknown."""
    try:
        info = pltpu.get_tpu_info()
        cap = getattr(info, "vmem_capacity_bytes", None)
        if cap:
            return int(cap)
    except Exception:
        pass
    return 64 * 1024 * 1024  # assume the smallest (v7x per-TC)


# ---------------------------------------------------------------------------
# Kernels
# ---------------------------------------------------------------------------
def _mlp_kernel_single(x_ref, w1_ref, b1_ref, w2_ref, b2_ref, o_ref):
    """Whole reduction dim fits VMEM: one K step, no accumulator scratch.
    x: [tm, D_p] bf16   w1: [D_p, H_p] bf16   b1: [1, H_p] f32
    w2: [H_p, E_p] bf16 b2: [1, E_p]  f32     o : [tm, E_p] f32
    """
    h = jnp.dot(x_ref[...], w1_ref[...], preferred_element_type=jnp.float32)
    h = jnp.maximum(h + b1_ref[...], 0.0)
    out = jnp.dot(h.astype(w2_ref.dtype), w2_ref[...],
                  preferred_element_type=jnp.float32) + b2_ref[...]
    o_ref[...] = out.astype(o_ref.dtype)


def _mlp_kernel_ktiled(x_ref, w1_ref, b1_ref, w2_ref, b2_ref, o_ref, acc_ref):
    """K-tiled first matmul.  acc_ref [tm, H_p] f32 persists across the K axis
    and is initialized with b1 (saves one full-tile add in the epilogue)."""
    k = pl.program_id(1)

    @pl.when(k == 0)
    def _():
        acc_ref[...] = jnp.broadcast_to(b1_ref[...], acc_ref.shape)

    acc_ref[...] += jnp.dot(x_ref[...], w1_ref[...],
                            preferred_element_type=jnp.float32)

    @pl.when(k == pl.num_programs(1) - 1)
    def _():
        h = jnp.maximum(acc_ref[...], 0.0)
        out = jnp.dot(h.astype(w2_ref.dtype), w2_ref[...],
                      preferred_element_type=jnp.float32) + b2_ref[...]
        o_ref[...] = out.astype(o_ref.dtype)


# ---------------------------------------------------------------------------
# SiameseNet wrapper (shared-weight twin forward)
# ---------------------------------------------------------------------------
class SiameseNetPallas:
    """Applies the same Pallas embedding kernel to two inputs (shared weights).

    Weights are prepared (bf16 cast + zero padding to 128-lane multiples) once
    at construction; forward calls only pad the activations.
    """

    def __init__(self, params):
        w1 = jnp.asarray(params["w1"])
        b1 = jnp.asarray(params["b1"]).reshape(1, -1)
        w2 = jnp.asarray(params["w2"])
        b2 = jnp.asarray(params["b2"]).reshape(1, -1)

        D, H = w1.shape
        E = w2.shape[1]
        self.D, self.H, self.E = D, H, E
        self.H_p = _round_up(H, 128)
        self.E_p = _round_up(E, 128)

        # ---- per-generation budgets ------------------------------------
        vmem_cap = _vmem_capacity_bytes()
        self.vmem_ceiling = int(0.75 * vmem_cap)               # leave headroom
        self.tm_cap = 512 if vmem_cap >= 96 * 1024 * 1024 else 256

        # ---- K-tiling plan (single shot whenever it fits) ---------------
        D_128 = _round_up(D, 128)
        resident = (2 * self.H_p * self.E_p * 2                 # W2 (bf16, 2 bufs)
                    + 2 * (self.H_p + self.E_p) * 4             # biases (f32)
                    + self.tm_cap * self.H_p * 4                # acc scratch
                    + 2 * self.tm_cap * self.E_p * 4)           # output tiles
        budget = max(self.vmem_ceiling - resident - (4 << 20), 4 << 20)

        def stream_bytes(tk):  # double-buffered x tile + W1 K-slab
            return 2 * self.tm_cap * tk * 2 + 2 * tk * self.H_p * 2

        if stream_bytes(D_128) <= budget:
            tk, D_p = D_128, D_128                              # one K step
        else:
            num_k = max(2, _cdiv(D_128, 512))
            while True:
                tk = 128 * _cdiv(D_128, 128 * num_k)
                if stream_bytes(tk) <= budget or tk == 128:
                    break
                num_k += 1
            D_p = _round_up(D_128, tk)
        self.tk, self.D_p = tk, D_p
        self.num_k = D_p // tk

        # ---- weights cast/padded ONCE (bf16 operands, f32 biases) -------
        cdt = jnp.bfloat16
        self.w1_p = jnp.zeros((D_p, self.H_p), cdt).at[:D, :H].set(w1.astype(cdt))
        self.w2_p = jnp.zeros((self.H_p, self.E_p), cdt).at[:H, :E].set(w2.astype(cdt))
        self.b1_p = jnp.zeros((1, self.H_p), jnp.float32).at[:, :H].set(
            b1.astype(jnp.float32))
        self.b2_p = jnp.zeros((1, self.E_p), jnp.float32).at[:, :E].set(
            b2.astype(jnp.float32))

    # ------------------------------------------------------------------
    def _embed_flat(self, x_flat):
        M, D = x_flat.shape
        assert D == self.D, f"expected flatten dim {self.D}, got {D}"
        D_p, H_p, E_p, tk = self.D_p, self.H_p, self.E_p, self.tk

        # bf16 packs 16 rows per sublane group: keep the M tile vreg-dense.
        M_16 = _round_up(max(M, 16), 16)
        tm = min(M_16, self.tm_cap)
        # Expose >=2 "parallel" grid steps when the batch allows (v7x megacore).
        if M_16 // tm < 2 and M_16 >= 32:
            tm = _round_up(_cdiv(M_16, 2), 16)
        M_p = _round_up(M_16, tm)
        n_m = M_p // tm

        x_p = jnp.zeros((M_p, D_p), jnp.bfloat16).at[:M, :D].set(
            x_flat.astype(jnp.bfloat16))

        # VMEM estimate (double-buffered inputs/outputs + accumulator).
        vmem_est = (2 * tm * tk * 2 + 2 * tk * H_p * 2
                    + 2 * H_p * E_p * 2 + 2 * (H_p + E_p) * 4
                    + 2 * tm * E_p * 4
                    + (tm * H_p * 4 if self.num_k > 1 else 0))
        vmem_limit = int(min(max(2 * vmem_est, 16 << 20), self.vmem_ceiling))

        # W1 is re-streamed once per M tile only on the K-tiled path
        # (constant-index operands are not re-fetched between grid steps).
        w1_reads = n_m if self.num_k > 1 else 1
        cost = pl.CostEstimate(
            flops=2 * M_p * D_p * H_p + 2 * M_p * H_p * E_p,
            transcendentals=0,
            bytes_accessed=int(x_p.size * 2
                               + w1_reads * self.w1_p.size * 2
                               + self.w2_p.size * 2
                               + (H_p + E_p) * 4
                               + M_p * E_p * 4),
        )

        if self.num_k == 1:
            grid = (n_m,)
            in_specs = [
                pl.BlockSpec((tm, D_p), lambda i: (i, 0)),      # x tile
                pl.BlockSpec((D_p, H_p), lambda i: (0, 0)),     # W1 (resident)
                pl.BlockSpec((1, H_p), lambda i: (0, 0)),       # b1
                pl.BlockSpec((H_p, E_p), lambda i: (0, 0)),     # W2
                pl.BlockSpec((1, E_p), lambda i: (0, 0)),       # b2
            ]
            out_spec = pl.BlockSpec((tm, E_p), lambda i: (i, 0))
            scratch = []
            kernel = _mlp_kernel_single
            dims = ("parallel",)
        else:
            grid = (n_m, self.num_k)
            in_specs = [
                pl.BlockSpec((tm, tk), lambda i, k: (i, k)),    # x tile
                pl.BlockSpec((tk, H_p), lambda i, k: (k, 0)),   # W1 K-slab
                pl.BlockSpec((1, H_p), lambda i, k: (0, 0)),    # b1 (resident)
                pl.BlockSpec((H_p, E_p), lambda i, k: (0, 0)),  # W2 (resident)
                pl.BlockSpec((1, E_p), lambda i, k: (0, 0)),    # b2 (resident)
            ]
            out_spec = pl.BlockSpec((tm, E_p), lambda i, k: (i, 0))
            scratch = [pltpu.VMEM((tm, H_p), jnp.float32)]
            kernel = _mlp_kernel_ktiled
            dims = ("parallel", "arbitrary")

        out_p = pl.pallas_call(
            kernel,
            out_shape=jax.ShapeDtypeStruct((M_p, E_p), jnp.float32),
            grid_spec=pltpu.PrefetchScalarGridSpec(
                num_scalar_prefetch=0,
                grid=grid,
                in_specs=in_specs,
                out_specs=out_spec,
                scratch_shapes=scratch,
            ),
            compiler_params=pltpu.CompilerParams(
                dimension_semantics=dims,
                vmem_limit_bytes=vmem_limit,
            ),
            cost_estimate=cost,
        )(x_p, self.w1_p, self.b1_p, self.w2_p, self.b2_p)

        return out_p[:M, :self.E]

    # ------------------------------------------------------------------
    def get_embedding(self, x):
        return self._embed_flat(x.reshape(x.shape[0], -1))

    def __call__(self, x1, x2):
        # Fuse both Siamese branches into ONE pallas_call: shared weights are
        # streamed once and the batch axis is twice as full for the MXU.
        B1 = x1.shape[0]
        x = jnp.concatenate(
            [x1.reshape(B1, -1), x2.reshape(x2.shape[0], -1)], axis=0)
        out = self._embed_flat(x)
        return out[:B1], out[B1:]


def init_params(key, in_features, hidden, embed_dim):
    k1, k2 = jax.random.split(key)
    scale1 = 1.0 / jnp.sqrt(jnp.float32(in_features))
    scale2 = 1.0 / jnp.sqrt(jnp.float32(hidden))
    return {
        "w1": jax.random.normal(k1, (in_features, hidden), jnp.float32) * scale1,
        "b1": jnp.zeros((1, hidden), jnp.float32),
        "w2": jax.random.normal(k2, (hidden, embed_dim), jnp.float32) * scale2,
        "b2": jnp.zeros((1, embed_dim), jnp.float32),
    }


if __name__ == "__main__":
    # Small deterministic example: batch=2, channels=4, spatial=16x16
    B, C, Hh, Ww = 2, 4, 16, 16
    D = C * Hh * Ww        # 1024 flattened features
    HIDDEN = 256
    EMBED = 128

    key = jax.random.PRNGKey(0)
    kx1, kx2, kp = jax.random.split(key, 3)

    x1 = jax.random.normal(kx1, (B, C, Hh, Ww), jnp.float32)
    x2 = jax.random.normal(kx2, (B, C, Hh, Ww), jnp.float32)

    params = init_params(kp, D, HIDDEN, EMBED)
    net = SiameseNetPallas(params)

    out1, out2 = net(x1, x2)
    jax.block_until_ready((out1, out2))

    # Pure-JAX reference with matching bf16 operand rounding (f32 accumulate).
    def ref_embed(x):
        xb = x.reshape(x.shape[0], -1).astype(jnp.bfloat16).astype(jnp.float32)
        w1b = params["w1"].astype(jnp.bfloat16).astype(jnp.float32)
        w2b = params["w2"].astype(jnp.bfloat16).astype(jnp.float32)
        h = jnp.maximum(xb @ w1b + params["b1"], 0.0)
        hb = h.astype(jnp.bfloat16).astype(jnp.float32)
        return hb @ w2b + params["b2"]

    r1, r2 = ref_embed(x1), ref_embed(x2)
    assert out1.shape == (B, EMBED) and out2.shape == (B, EMBED)
    assert jnp.allclose(out1, r1, atol=5e-3, rtol=5e-3)
    assert jnp.allclose(out2, r2, atol=5e-3, rtol=5e-3)

    # Also exercise the single-branch path.
    e1 = net.get_embedding(x1)
    jax.block_until_ready(e1)
    assert jnp.allclose(e1, r1, atol=5e-3, rtol=5e-3)

    print("KERNEL_OK")
</pallas_src>

<mosaic_0001>
module attributes {stable_mosaic.version = 11 : i64} {
  func.func @_mlp_kernel_single(%arg0: i32, %arg1: memref<16x1024xbf16, #tpu.memory_space<vmem>>, %arg2: memref<1024x256xbf16, #tpu.memory_space<vmem>>, %arg3: memref<1x256xf32, #tpu.memory_space<vmem>>, %arg4: memref<256x128xbf16, #tpu.memory_space<vmem>>, %arg5: memref<1x128xf32, #tpu.memory_space<vmem>>, %arg6: memref<16x128xf32, #tpu.memory_space<vmem>>) attributes {dimension_semantics = [#tpu.dimension_semantics<parallel>], iteration_bounds = array<i64: 1>, scalar_prefetch = 0 : i64, scratch_operands = 0 : i64, tpu.core_type = #tpu.core_type<tc>, window_params = [{transform_indices = @transform_0, window_bounds = array<i64: 16, 1024>}, {pipeline_mode = #tpu.pipeline_mode<synchronous>, transform_indices = @transform_1, window_bounds = array<i64: 1024, 256>}, {pipeline_mode = #tpu.pipeline_mode<synchronous>, transform_indices = @transform_2, window_bounds = array<i64: 1, 256>}, {pipeline_mode = #tpu.pipeline_mode<synchronous>, transform_indices = @transform_3, window_bounds = array<i64: 256, 128>}, {pipeline_mode = #tpu.pipeline_mode<synchronous>, transform_indices = @transform_4, window_bounds = array<i64: 1, 128>}, {transform_indices = @transform_5, window_bounds = array<i64: 16, 128>}]} {
    %c0 = arith.constant 0 : index
    %c0_0 = arith.constant 0 : index
    %0 = vector.load %arg1[%c0, %c0_0] : memref<16x1024xbf16, #tpu.memory_space<vmem>>, vector<16x1024xbf16>
    %c0_1 = arith.constant 0 : index
    %c0_2 = arith.constant 0 : index
    %1 = vector.load %arg2[%c0_1, %c0_2] : memref<1024x256xbf16, #tpu.memory_space<vmem>>, vector<1024x256xbf16>
    %cst = arith.constant dense<0.000000e+00> : vector<16x256xf32>
    %2 = tpu.matmul %0, %1, %cst {dimension_numbers = #tpu.dot_dimension_numbers<[1], [0], [0], [1], [0, 0, 1, 1], [], []>} : vector<16x1024xbf16>, vector<1024x256xbf16>, vector<16x256xf32> -> vector<16x256xf32>
    %c0_3 = arith.constant 0 : index
    %c0_4 = arith.constant 0 : index
    %3 = vector.load %arg3[%c0_3, %c0_4] : memref<1x256xf32, #tpu.memory_space<vmem>>, vector<1x256xf32>
    %4 = vector.broadcast %3 : vector<1x256xf32> to vector<16x256xf32>
    %5 = arith.addf %2, %4 : vector<16x256xf32>
    %cst_5 = arith.constant 0.000000e+00 : f32
    %6 = vector.broadcast %cst_5 : f32 to vector<16x256xf32>
    %7 = arith.maximumf %5, %6 : vector<16x256xf32>
    %8 = arith.truncf %7 : vector<16x256xf32> to vector<16x256xbf16>
    %c0_6 = arith.constant 0 : index
    %c0_7 = arith.constant 0 : index
    %9 = vector.load %arg4[%c0_6, %c0_7] : memref<256x128xbf16, #tpu.memory_space<vmem>>, vector<256x128xbf16>
    %cst_8 = arith.constant dense<0.000000e+00> : vector<16x128xf32>
    %10 = tpu.matmul %8, %9, %cst_8 {dimension_numbers = #tpu.dot_dimension_numbers<[1], [0], [0], [1], [0, 0, 1, 1], [], []>} : vector<16x256xbf16>, vector<256x128xbf16>, vector<16x128xf32> -> vector<16x128xf32>
    %c0_9 = arith.constant 0 : index
    %c0_10 = arith.constant 0 : index
    %11 = vector.load %arg5[%c0_9, %c0_10] : memref<1x128xf32, #tpu.memory_space<vmem>>, vector<1x128xf32>
    %12 = vector.broadcast %11 : vector<1x128xf32> to vector<16x128xf32>
    %13 = arith.addf %10, %12 : vector<16x128xf32>
    %c0_11 = arith.constant 0 : index
    %c0_12 = arith.constant 0 : index
    %14 = vector.load %arg6[%c0_11, %c0_12] : memref<16x128xf32, #tpu.memory_space<vmem>>, vector<16x128xf32>
    tpu.vector_store %arg6[%c0_11, %c0_12], %13 {strides = array<i32>} : memref<16x128xf32, #tpu.memory_space<vmem>>, vector<16x128xf32>,
    return
  }
  func.func @transform_0(%arg0: i32) -> (i32, i32) {
    %c0_i32 = arith.constant 0 : i32
    %c0_i32_0 = arith.constant 0 : i32
    return %arg0, %c0_i32 : i32, i32
  }
  func.func @transform_1(%arg0: i32) -> (i32, i32) {
    %c0_i32 = arith.constant 0 : i32
    %c0_i32_0 = arith.constant 0 : i32
    %c0_i32_1 = arith.constant 0 : i32
    return %c0_i32, %c0_i32_0 : i32, i32
  }
  func.func @transform_2(%arg0: i32) -> (i32, i32) {
    %c0_i32 = arith.constant 0 : i32
    %c0_i32_0 = arith.constant 0 : i32
    %c0_i32_1 = arith.constant 0 : i32
    return %c0_i32, %c0_i32_0 : i32, i32
  }
  func.func @transform_3(%arg0: i32) -> (i32, i32) {
    %c0_i32 = arith.constant 0 : i32
    %c0_i32_0 = arith.constant 0 : i32
    %c0_i32_1 = arith.constant 0 : i32
    return %c0_i32, %c0_i32_0 : i32, i32
  }
  func.func @transform_4(%arg0: i32) -> (i32, i32) {
    %c0_i32 = arith.constant 0 : i32
    %c0_i32_0 = arith.constant 0 : i32
    %c0_i32_1 = arith.constant 0 : i32
    return %c0_i32, %c0_i32_0 : i32, i32
  }
  func.func @transform_5(%arg0: i32) -> (i32, i32) {
    %c0_i32 = arith.constant 0 : i32
    %c0_i32_0 = arith.constant 0 : i32
    return %arg0, %c0_i32 : i32, i32
  }
}

</mosaic_0001>

<llo_original>
// kernel: tpu_custom_call.1
$region0: #{tpu_custom_call.1}
  #allocation0 [shape = 'u32[]', space=smem, size = 0x4, offset = 0x4, fixed_abs, tag = 'smem constant byte address 0x4 - core index']
  #allocation1 [shape = 'u32[144,128]{1,0:T(1,128)}', space=vmem, size = 0x12000, scoped, tag = 'internal scratch']
  %s0 = inlined_call_operand.hbm [shape: bf16[16,1024], index: 0, kind: input, shape index: {}]
  %s1 = inlined_call_operand.hbm [shape: bf16[1024,256], index: 1, kind: input, shape index: {}]
  %s2 = inlined_call_operand.vmem [shape: f32[1,256], index: 2, kind: input, shape index: {}]
  %s3 = inlined_call_operand.hbm [shape: bf16[256,128], index: 3, kind: input, shape index: {}]
  %s4 = inlined_call_operand.vmem [shape: f32[1,128], index: 4, kind: input, shape index: {}]
  %s5 = inlined_call_operand.hbm [shape: f32[16,128], index: 5, kind: output, shape index: {}]
  %s6 = sld [smem:[#allocation0]]
  $region42: #{tpu_custom_call.1} parent=0
    _
  %s8 = ssub.s32 1, %s6
  %s9 = scalar_select 0, %s8, %s6
  $region1: #{tpu_custom_call.1} parent=0
    #allocation2 [shape = 'u8[32768]{0}', space=vmem, size = 0x8000, scoped, tag = 'input window, operand 0, single buffered']
    #allocation3 [shape = 's32[1]{0}', space=sflag, size = 0x4, scoped, tag = 'scoped memory for tpu_custom_call.1']
    #allocation4 [shape = 's32[1]{0}', space=sflag, size = 0x4, scoped, tag = 'scoped memory for tpu_custom_call.1']
    #allocation5 [shape = 'u8[524288]{0}', space=vmem, size = 0x80000, scoped, tag = 'input window, operand 1, single buffered']
    #allocation6 [shape = 's32[1]{0}', space=sflag, size = 0x4, scoped, tag = 'scoped memory for tpu_custom_call.1']
    #allocation7 [shape = 'u8[65536]{0}', space=vmem, size = 0x10000, scoped, tag = 'input window, operand 3, single buffered']
    #allocation8 [shape = 'u8[8192]{0}', space=vmem, size = 0x2000, scoped, tag = 'output window, operand 0, single buffered']
    %10 = vsyncpa [#allocation3], 0
    %11 = vsyncpa [#allocation6], 0
    %12 = vsyncpa [#allocation4], 0
    // Predicated region
    $region2: #{tpu_custom_call.1} parent=1 // pred_check
      _
    $region3: #{tpu_custom_call.1} parent=1 // pred_check_branch
      %14 = sbr.rel (0) target = $region5
    $region4: #{tpu_custom_call.1} parent=1 // pred_region
      %s16 = ssub.s32 1024, 1024
      %17 = vsyncadd [#allocation3], %s16
      %s18 = sshll.u32 [#allocation2], 4
      %s19 = int_to_ptr.vmem [resolvable:$true] %s18
      %24 = dma.hbm_to_vmem [thread:$0]  %s0, 1024, %s19, [#allocation3], 512, 512, 32
    $region5: #{tpu_custom_call.1} parent=1 // pred_fallthru
      _
    // Predicated region
    $region6: #{tpu_custom_call.1} parent=1 // pred_check
      _
    $region7: #{tpu_custom_call.1} parent=1 // pred_check_branch
      %26 = sbr.rel (0) target = $region9
    $region8: #{tpu_custom_call.1} parent=1 // pred_region
      %s28 = ssub.s32 16384, 16384
      %29 = vsyncadd [#allocation6], %s28
      %s30 = sshll.u32 [#allocation5], 4
      %s31 = int_to_ptr.vmem [resolvable:$true] %s30
      %36 = dma.hbm_to_vmem [thread:$0]  %s1, 16384, %s31, [#allocation6], 128, 128, 8
    $region9: #{tpu_custom_call.1} parent=1 // pred_fallthru
      _
    // Predicated region
    $region10: #{tpu_custom_call.1} parent=1 // pred_check
      _
    $region11: #{tpu_custom_call.1} parent=1 // pred_check_branch
      %38 = sbr.rel (0) target = $region13
    $region12: #{tpu_custom_call.1} parent=1 // pred_region
      _
    $region13: #{tpu_custom_call.1} parent=1 // pred_fallthru
      _
    // Predicated region
    $region14: #{tpu_custom_call.1} parent=1 // pred_check
      _
    $region15: #{tpu_custom_call.1} parent=1 // pred_check_branch
      %40 = sbr.rel (0) target = $region17
    $region16: #{tpu_custom_call.1} parent=1 // pred_region
      %s42 = ssub.s32 2048, 2048
      %43 = vsyncadd [#allocation6], %s42
      %s44 = sshll.u32 [#allocation7], 4
      %s45 = int_to_ptr.vmem [resolvable:$true] %s44
      %50 = dma.hbm_to_vmem [thread:$0]  %s3, 2048, %s45, [#allocation6], 64, 64, 4
    $region17: #{tpu_custom_call.1} parent=1 // pred_fallthru
      _
    // Predicated region
    $region18: #{tpu_custom_call.1} parent=1 // pred_check
      _
    $region19: #{tpu_custom_call.1} parent=1 // pred_check_branch
      %52 = sbr.rel (0) target = $region21
    $region20: #{tpu_custom_call.1} parent=1 // pred_region
      _
    $region21: #{tpu_custom_call.1} parent=1 // pred_fallthru
      _
    // Predicated region
    $region22: #{tpu_custom_call.1} parent=1 // pred_check
      _
    $region23: #{tpu_custom_call.1} parent=1 // pred_check_branch
      %54 = sbr.rel (0) target = $region25
    $region24: #{tpu_custom_call.1} parent=1 // pred_region
      %55 = dma.done [#allocation3], 1024
    $region25: #{tpu_custom_call.1} parent=1 // pred_fallthru
      _
    // Predicated region
    $region26: #{tpu_custom_call.1} parent=1 // pred_check
      _
    $region27: #{tpu_custom_call.1} parent=1 // pred_check_branch
      %57 = sbr.rel (0) target = $region29
    $region28: #{tpu_custom_call.1} parent=1 // pred_region
      %58 = dma.done [#allocation6], 16384
    $region29: #{tpu_custom_call.1} parent=1 // pred_fallthru
      _
    // Predicated region
    $region30: #{tpu_custom_call.1} parent=1 // pred_check
      _
    $region31: #{tpu_custom_call.1} parent=1 // pred_check_branch
      %60 = sbr.rel (0) target = $region33
    $region32: #{tpu_custom_call.1} parent=1 // pred_region
      %61 = dma.done [#allocation6], 2048
    $region33: #{tpu_custom_call.1} parent=1 // pred_fallthru
      _
    %v63 = vld [vmem:[#allocation2] sm:$0xff]
    %v64 = vld [vmem:[#allocation2 + $0x8] sm:$0xff]
    %v65 = vld [vmem:[#allocation2 + $0x10] sm:$0xff]
    %v66 = vld [vmem:[#allocation2 + $0x18] sm:$0xff]
    %v67 = vld [vmem:[#allocation2 + $0x20] sm:$0xff]
    %v68 = vld [vmem:[#allocation2 + $0x28] sm:$0xff]
    %v69 = vld [vmem:[#allocation2 + $0x30] sm:$0xff]
    %v70 = vld [vmem:[#allocation2 + $0x38] sm:$0xff]
    %v71 = vld [vmem:[#allocation5] sm:$0xff]
    %v72 = vld [vmem:[#allocation5 + $0x8] sm:$0xff]
    %v73 = vld [vmem:[#allocation5 + $0x10] sm:$0xff]
    %v74 = vld [vmem:[#allocation5 + $0x18] sm:$0xff]
    %v75 = vld [vmem:[#allocation5 + $0x20] sm:$0xff]
    %v76 = vld [vmem:[#allocation5 + $0x28] sm:$0xff]
    %v77 = vld [vmem:[#allocation5 + $0x30] sm:$0xff]
    %v78 = vld [vmem:[#allocation5 + $0x38] sm:$0xff]
    %v79 = vld [vmem:[#allocation5 + $0x40] sm:$0xff]
    %v80 = vld [vmem:[#allocation5 + $0x48] sm:$0xff]
    %v81 = vld [vmem:[#allocation5 + $0x50] sm:$0xff]
    %v82 = vld [vmem:[#allocation5 + $0x58] sm:$0xff]
    %v83 = vld [vmem:[#allocation5 + $0x60] sm:$0xff]
    %v84 = vld [vmem:[#allocation5 + $0x68] sm:$0xff]
    %v85 = vld [vmem:[#allocation5 + $0x70] sm:$0xff]
    %v86 = vld [vmem:[#allocation5 + $0x78] sm:$0xff]
    %v87 = vld [vmem:[#allocation5 + $0x80] sm:$0xff]
    %v88 = vld [vmem:[#allocation5 + $0x88] sm:$0xff]
    %v89 = vld [vmem:[#allocation5 + $0x90] sm:$0xff]
    %v90 = vld [vmem:[#allocation5 + $0x98] sm:$0xff]
    %v91 = vld [vmem:[#allocation5 + $0xa0] sm:$0xff]
    %v92 = vld [vmem:[#allocation5 + $0xa8] sm:$0xff]
    %v93 = vld [vmem:[#allocation5 + $0xb0] sm:$0xff]
    %v94 = vld [vmem:[#allocation5 + $0xb8] sm:$0xff]
    %v95 = vld [vmem:[#allocation5 + $0xc0] sm:$0xff]
    %v96 = vld [vmem:[#allocation5 + $0xc8] sm:$0xff]
    %v97 = vld [vmem:[#allocation5 + $0xd0] sm:$0xff]
    %v98 = vld [vmem:[#allocation5 + $0xd8] sm:$0xff]
    %v99 = vld [vmem:[#allocation5 + $0xe0] sm:$0xff]
    %v100 = vld [vmem:[#allocation5 + $0xe8] sm:$0xff]
    %v101 = vld [vmem:[#allocation5 + $0xf0] sm:$0xff]
    %v102 = vld [vmem:[#allocation5 + $0xf8] sm:$0xff]
    %v103 = vld [vmem:[#allocation5 + $0x100] sm:$0xff]
    %v104 = vld [vmem:[#allocation5 + $0x108] sm:$0xff]
    %v105 = vld [vmem:[#allocation5 + $0x110] sm:$0xff]
    %v106 = vld [vmem:[#allocation5 + $0x118] sm:$0xff]
    %v107 = vld [vmem:[#allocation5 + $0x120] sm:$0xff]
    %v108 = vld [vmem:[#allocation5 + $0x128] sm:$0xff]
    %v109 = vld [vmem:[#allocation5 + $0x130] sm:$0xff]
    %v110 = vld [vmem:[#allocation5 + $0x138] sm:$0xff]
    %v111 = vld [vmem:[#allocation5 + $0x140] sm:$0xff]
    %v112 = vld [vmem:[#allocation5 + $0x148] sm:$0xff]
    %v113 = vld [vmem:[#allocation5 + $0x150] sm:$0xff]
    %v114 = vld [vmem:[#allocation5 + $0x158] sm:$0xff]
    %v115 = vld [vmem:[#allocation5 + $0x160] sm:$0xff]
    %v116 = vld [vmem:[#allocation5 + $0x168] sm:$0xff]
    %v117 = vld [vmem:[#allocation5 + $0x170] sm:$0xff]
    %v118 = vld [vmem:[#allocation5 + $0x178] sm:$0xff]
    %v119 = vld [vmem:[#allocation5 + $0x180] sm:$0xff]
    %v120 = vld [vmem:[#allocation5 + $0x188] sm:$0xff]
    %v121 = vld [vmem:[#allocation5 + $0x190] sm:$0xff]
    %v122 = vld [vmem:[#allocation5 + $0x198] sm:$0xff]
    %v123 = vld [vmem:[#allocation5 + $0x1a0] sm:$0xff]
    %v124 = vld [vmem:[#allocation5 + $0x1a8] sm:$0xff]
    %v125 = vld [vmem:[#allocation5 + $0x1b0] sm:$0xff]
    %v126 = vld [vmem:[#allocation5 + $0x1b8] sm:$0xff]
    %v127 = vld [vmem:[#allocation5 + $0x1c0] sm:$0xff]
    %v128 = vld [vmem:[#allocation5 + $0x1c8] sm:$0xff]
    %v129 = vld [vmem:[#allocation5 + $0x1d0] sm:$0xff]
    %v130 = vld [vmem:[#allocation5 + $0x1d8] sm:$0xff]
    %v131 = vld [vmem:[#allocation5 + $0x1e0] sm:$0xff]
    %v132 = vld [vmem:[#allocation5 + $0x1e8] sm:$0xff]
    %v133 = vld [vmem:[#allocation5 + $0x1f0] sm:$0xff]
    %v134 = vld [vmem:[#allocation5 + $0x1f8] sm:$0xff]
    %v135 = vld [vmem:[#allocation5 + $0x200] sm:$0xff]
    %v136 = vld [vmem:[#allocation5 + $0x208] sm:$0xff]
    %v137 = vld [vmem:[#allocation5 + $0x210] sm:$0xff]
    %v138 = vld [vmem:[#allocation5 + $0x218] sm:$0xff]
    %v139 = vld [vmem:[#allocation5 + $0x220] sm:$0xff]
    %v140 = vld [vmem:[#allocation5 + $0x228] sm:$0xff]
    %v141 = vld [vmem:[#allocation5 + $0x230] sm:$0xff]
    %v142 = vld [vmem:[#allocation5 + $0x238] sm:$0xff]
    %v143 = vld [vmem:[#allocation5 + $0x240] sm:$0xff]
    %v144 = vld [vmem:[#allocation5 + $0x248] sm:$0xff]
    %v145 = vld [vmem:[#allocation5 + $0x250] sm:$0xff]
    %v146 = vld [vmem:[#allocation5 + $0x258] sm:$0xff]
    %v147 = vld [vmem:[#allocation5 + $0x260] sm:$0xff]
    %v148 = vld [vmem:[#allocation5 + $0x268] sm:$0xff]
    %v149 = vld [vmem:[#allocation5 + $0x270] sm:$0xff]
    %v150 = vld [vmem:[#allocation5 + $0x278] sm:$0xff]
    %v151 = vld [vmem:[#allocation5 + $0x280] sm:$0xff]
    %v152 = vld [vmem:[#allocation5 + $0x288] sm:$0xff]
    %v153 = vld [vmem:[#allocation5 + $0x290] sm:$0xff]
    %v154 = vld [vmem:[#allocation5 + $0x298] sm:$0xff]
    %v155 = vld [vmem:[#allocation5 + $0x2a0] sm:$0xff]
    %v156 = vld [vmem:[#allocation5 + $0x2a8] sm:$0xff]
    %v157 = vld [vmem:[#allocation5 + $0x2b0] sm:$0xff]
    %v158 = vld [vmem:[#allocation5 + $0x2b8] sm:$0xff]
    %v159 = vld [vmem:[#allocation5 + $0x2c0] sm:$0xff]
    %v160 = vld [vmem:[#allocation5 + $0x2c8] sm:$0xff]
    %v161 = vld [vmem:[#allocation5 + $0x2d0] sm:$0xff]
    %v162 = vld [vmem:[#allocation5 + $0x2d8] sm:$0xff]
    %v163 = vld [vmem:[#allocation5 + $0x2e0] sm:$0xff]
    %v164 = vld [vmem:[#allocation5 + $0x2e8] sm:$0xff]
    %v165 = vld [vmem:[#allocation5 + $0x2f0] sm:$0xff]
    %v166 = vld [vmem:[#allocation5 + $0x2f8] sm:$0xff]
    %v167 = vld [vmem:[#allocation5 + $0x300] sm:$0xff]
    %v168 = vld [vmem:[#allocation5 + $0x308] sm:$0xff]
    %v169 = vld [vmem:[#allocation5 + $0x310] sm:$0xff]
    %v170 = vld [vmem:[#allocation5 + $0x318] sm:$0xff]
    %v171 = vld [vmem:[#allocation5 + $0x320] sm:$0xff]
    %v172 = vld [vmem:[#allocation5 + $0x328] sm:$0xff]
    %v173 = vld [vmem:[#allocation5 + $0x330] sm:$0xff]
    %v174 = vld [vmem:[#allocation5 + $0x338] sm:$0xff]
    %v175 = vld [vmem:[#allocation5 + $0x340] sm:$0xff]
    %v176 = vld [vmem:[#allocation5 + $0x348] sm:$0xff]
    %v177 = vld [vmem:[#allocation5 + $0x350] sm:$0xff]
    %v178 = vld [vmem:[#allocation5 + $0x358] sm:$0xff]
    %v179 = vld [vmem:[#allocation5 + $0x360] sm:$0xff]
    %v180 = vld [vmem:[#allocation5 + $0x368] sm:$0xff]
    %v181 = vld [vmem:[#allocation5 + $0x370] sm:$0xff]
    %v182 = vld [vmem:[#allocation5 + $0x378] sm:$0xff]
    %v183 = vld [vmem:[#allocation5 + $0x380] sm:$0xff]
    %v184 = vld [vmem:[#allocation5 + $0x388] sm:$0xff]
    %v185 = vld [vmem:[#allocation5 + $0x390] sm:$0xff]
    %v186 = vld [vmem:[#allocation5 + $0x398] sm:$0xff]
    %v187 = vld [vmem:[#allocation5 + $0x3a0] sm:$0xff]
    %v188 = vld [vmem:[#allocation5 + $0x3a8] sm:$0xff]
    %v189 = vld [vmem:[#allocation5 + $0x3b0] sm:$0xff]
    %v190 = vld [vmem:[#allocation5 + $0x3b8] sm:$0xff]
    %v191 = vld [vmem:[#allocation5 + $0x3c0] sm:$0xff]
    %v192 = vld [vmem:[#allocation5 + $0x3c8] sm:$0xff]
    %v193 = vld [vmem:[#allocation5 + $0x3d0] sm:$0xff]
    %v194 = vld [vmem:[#allocation5 + $0x3d8] sm:$0xff]
    %v195 = vld [vmem:[#allocation5 + $0x3e0] sm:$0xff]
    %v196 = vld [vmem:[#allocation5 + $0x3e8] sm:$0xff]
    %v197 = vld [vmem:[#allocation5 + $0x3f0] sm:$0xff]
    %v198 = vld [vmem:[#allocation5 + $0x3f8] sm:$0xff]
    %v199 = vld [vmem:[%s2] sm:$0x3]
    %v201 = vlaneseq
    %v202 = vshrl.u32 %v201, 7
    %v203 = vsub.s32 0, %v202
    %v204 = vrot.slane %v199, %v203
    %v205 = vlaneseq
    %v206 = vshrl.u32 %v205, 7
    %v207 = vsub.s32 1, %v206
    %v208 = vrot.slane %v199, %v207
    %v219 = vunpack.c.l.b16 %v63
    %v220 = vunpack.c.h.b16 %v63
    %v221 = vunpack.c.l.b16 %v64
    %v222 = vunpack.c.h.b16 %v64
    %v223 = vunpack.c.l.b16 %v65
    %v224 = vunpack.c.h.b16 %v65
    %v225 = vunpack.c.l.b16 %v66
    %v226 = vunpack.c.h.b16 %v66
    %v227 = vunpack.c.l.b16 %v67
    %v228 = vunpack.c.h.b16 %v67
    %v229 = vunpack.c.l.b16 %v68
    %v230 = vunpack.c.h.b16 %v68
    %v231 = vunpack.c.l.b16 %v69
    %v232 = vunpack.c.h.b16 %v69
    %v233 = vunpack.c.l.b16 %v70
    %v234 = vunpack.c.h.b16 %v70
    %v235 = vpack.c.b16 %v227, %v219
    %v236 = vpack.c.b16 %v228, %v220
    %v237 = vpack.c.b16 %v229, %v221
    %v238 = vpack.c.b16 %v230, %v222
    %v239 = vpack.c.b16 %v231, %v223
    %v240 = vpack.c.b16 %v232, %v224
    %v241 = vpack.c.b16 %v233, %v225
    %v242 = vpack.c.b16 %v234, %v226
    %v379 = vunpack.c.l.b16 %v71
    %v380 = vunpack.c.h.b16 %v71
    %v381 = vunpack.c.l.b16 %v72
    %v382 = vunpack.c.h.b16 %v72
    %v383 = vunpack.c.l.b16 %v73
    %v384 = vunpack.c.h.b16 %v73
    %v385 = vunpack.c.l.b16 %v74
    %v386 = vunpack.c.h.b16 %v74
    %v387 = vunpack.c.l.b16 %v75
    %v388 = vunpack.c.h.b16 %v75
    %v389 = vunpack.c.l.b16 %v76
    %v390 = vunpack.c.h.b16 %v76
    %v391 = vunpack.c.l.b16 %v77
    %v392 = vunpack.c.h.b16 %v77
    %v393 = vunpack.c.l.b16 %v78
    %v394 = vunpack.c.h.b16 %v78
    %v395 = vunpack.c.l.b16 %v79
    %v396 = vunpack.c.h.b16 %v79
    %v397 = vunpack.c.l.b16 %v80
    %v398 = vunpack.c.h.b16 %v80
    %v399 = vunpack.c.l.b16 %v81
    %v400 = vunpack.c.h.b16 %v81
    %v401 = vunpack.c.l.b16 %v82
    %v402 = vunpack.c.h.b16 %v82
    %v403 = vunpack.c.l.b16 %v83
    %v404 = vunpack.c.h.b16 %v83
    %v405 = vunpack.c.l.b16 %v84
    %v406 = vunpack.c.h.b16 %v84
    %v407 = vunpack.c.l.b16 %v85
    %v408 = vunpack.c.h.b16 %v85
    %v409 = vunpack.c.l.b16 %v86
    %v410 = vunpack.c.h.b16 %v86
    %v411 = vunpack.c.l.b16 %v87
    %v412 = vunpack.c.h.b16 %v87
    %v413 = vunpack.c.l.b16 %v88
    %v414 = vunpack.c.h.b16 %v88
    %v415 = vunpack.c.l.b16 %v89
    %v416 = vunpack.c.h.b16 %v89
    %v417 = vunpack.c.l.b16 %v90
    %v418 = vunpack.c.h.b16 %v90
    %v419 = vunpack.c.l.b16 %v91
    %v420 = vunpack.c.h.b16 %v91
    %v421 = vunpack.c.l.b16 %v92
    %v422 = vunpack.c.h.b16 %v92
    %v423 = vunpack.c.l.b16 %v93
    %v424 = vunpack.c.h.b16 %v93
    %v425 = vunpack.c.l.b16 %v94
    %v426 = vunpack.c.h.b16 %v94
    %v427 = vunpack.c.l.b16 %v95
    %v428 = vunpack.c.h.b16 %v95
    %v429 = vunpack.c.l.b16 %v96
    %v430 = vunpack.c.h.b16 %v96
    %v431 = vunpack.c.l.b16 %v97
    %v432 = vunpack.c.h.b16 %v97
    %v433 = vunpack.c.l.b16 %v98
    %v434 = vunpack.c.h.b16 %v98
    %v435 = vunpack.c.l.b16 %v99
    %v436 = vunpack.c.h.b16 %v99
    %v437 = vunpack.c.l.b16 %v100
    %v438 = vunpack.c.h.b16 %v100
    %v439 = vunpack.c.l.b16 %v101
    %v440 = vunpack.c.h.b16 %v101
    %v441 = vunpack.c.l.b16 %v102
    %v442 = vunpack.c.h.b16 %v102
    %v443 = vunpack.c.l.b16 %v103
    %v444 = vunpack.c.h.b16 %v103
    %v445 = vunpack.c.l.b16 %v104
    %v446 = vunpack.c.h.b16 %v104
    %v447 = vunpack.c.l.b16 %v105
    %v448 = vunpack.c.h.b16 %v105
    %v449 = vunpack.c.l.b16 %v106
    %v450 = vunpack.c.h.b16 %v106
    %v451 = vunpack.c.l.b16 %v107
    %v452 = vunpack.c.h.b16 %v107
    %v453 = vunpack.c.l.b16 %v108
    %v454 = vunpack.c.h.b16 %v108
    %v455 = vunpack.c.l.b16 %v109
    %v456 = vunpack.c.h.b16 %v109
    %v457 = vunpack.c.l.b16 %v110
    %v458 = vunpack.c.h.b16 %v110
    %v459 = vunpack.c.l.b16 %v111
    %v460 = vunpack.c.h.b16 %v111
    %v461 = vunpack.c.l.b16 %v112
    %v462 = vunpack.c.h.b16 %v112
    %v463 = vunpack.c.l.b16 %v113
    %v464 = vunpack.c.h.b16 %v113
    %v465 = vunpack.c.l.b16 %v114
    %v466 = vunpack.c.h.b16 %v114
    %v467 = vunpack.c.l.b16 %v115
    %v468 = vunpack.c.h.b16 %v115
    %v469 = vunpack.c.l.b16 %v116
    %v470 = vunpack.c.h.b16 %v116
    %v471 = vunpack.c.l.b16 %v117
    %v472 = vunpack.c.h.b16 %v117
    %v473 = vunpack.c.l.b16 %v118
    %v474 = vunpack.c.h.b16 %v118
    %v475 = vunpack.c.l.b16 %v119
    %v476 = vunpack.c.h.b16 %v119
    %v477 = vunpack.c.l.b16 %v120
    %v478 = vunpack.c.h.b16 %v120
    %v479 = vunpack.c.l.b16 %v121
    %v480 = vunpack.c.h.b16 %v121
    %v481 = vunpack.c.l.b16 %v122
    %v482 = vunpack.c.h.b16 %v122
    %v483 = vunpack.c.l.b16 %v123
    %v484 = vunpack.c.h.b16 %v123
    %v485 = vunpack.c.l.b16 %v124
    %v486 = vunpack.c.h.b16 %v124
    %v487 = vunpack.c.l.b16 %v125
    %v488 = vunpack.c.h.b16 %v125
    %v489 = vunpack.c.l.b16 %v126
    %v490 = vunpack.c.h.b16 %v126
    %v491 = vunpack.c.l.b16 %v127
    %v492 = vunpack.c.h.b16 %v127
    %v493 = vunpack.c.l.b16 %v128
    %v494 = vunpack.c.h.b16 %v128
    %v495 = vunpack.c.l.b16 %v129
    %v496 = vunpack.c.h.b16 %v129
    %v497 = vunpack.c.l.b16 %v130
    %v498 = vunpack.c.h.b16 %v130
    %v499 = vunpack.c.l.b16 %v131
    %v500 = vunpack.c.h.b16 %v131
    %v501 = vunpack.c.l.b16 %v132
    %v502 = vunpack.c.h.b16 %v132
    %v503 = vunpack.c.l.b16 %v133
    %v504 = vunpack.c.h.b16 %v133
    %v505 = vunpack.c.l.b16 %v134
    %v506 = vunpack.c.h.b16 %v134
    %v507 = vunpack.c.l.b16 %v135
    %v508 = vunpack.c.h.b16 %v135
    %v509 = vunpack.c.l.b16 %v136
    %v510 = vunpack.c.h.b16 %v136
    %v511 = vunpack.c.l.b16 %v137
    %v512 = vunpack.c.h.b16 %v137
    %v513 = vunpack.c.l.b16 %v138
    %v514 = vunpack.c.h.b16 %v138
    %v515 = vunpack.c.l.b16 %v139
    %v516 = vunpack.c.h.b16 %v139
    %v517 = vunpack.c.l.b16 %v140
    %v518 = vunpack.c.h.b16 %v140
    %v519 = vunpack.c.l.b16 %v141
    %v520 = vunpack.c.h.b16 %v141
    %v521 = vunpack.c.l.b16 %v142
    %v522 = vunpack.c.h.b16 %v142
    %v523 = vunpack.c.l.b16 %v143
    %v524 = vunpack.c.h.b16 %v143
    %v525 = vunpack.c.l.b16 %v144
    %v526 = vunpack.c.h.b16 %v144
    %v527 = vunpack.c.l.b16 %v145
    %v528 = vunpack.c.h.b16 %v145
    %v529 = vunpack.c.l.b16 %v146
    %v530 = vunpack.c.h.b16 %v146
    %v531 = vunpack.c.l.b16 %v147
    %v532 = vunpack.c.h.b16 %v147
    %v533 = vunpack.c.l.b16 %v148
    %v534 = vunpack.c.h.b16 %v148
    %v535 = vunpack.c.l.b16 %v149
    %v536 = vunpack.c.h.b16 %v149
    %v537 = vunpack.c.l.b16 %v150
    %v538 = vunpack.c.h.b16 %v150
    %v539 = vunpack.c.l.b16 %v151
    %v540 = vunpack.c.h.b16 %v151
    %v541 = vunpack.c.l.b16 %v152
    %v542 = vunpack.c.h.b16 %v152
    %v543 = vunpack.c.l.b16 %v153
    %v544 = vunpack.c.h.b16 %v153
    %v545 = vunpack.c.l.b16 %v154
    %v546 = vunpack.c.h.b16 %v154
    %v547 = vunpack.c.l.b16 %v155
    %v548 = vunpack.c.h.b16 %v155
    %v549 = vunpack.c.l.b16 %v156
    %v550 = vunpack.c.h.b16 %v156
    %v551 = vunpack.c.l.b16 %v157
    %v552 = vunpack.c.h.b16 %v157
    %v553 = vunpack.c.l.b16 %v158
    %v554 = vunpack.c.h.b16 %v158
    %v555 = vunpack.c.l.b16 %v159
    %v556 = vunpack.c.h.b16 %v159
    %v557 = vunpack.c.l.b16 %v160
    %v558 = vunpack.c.h.b16 %v160
    %v559 = vunpack.c.l.b16 %v161
    %v560 = vunpack.c.h.b16 %v161
    %v561 = vunpack.c.l.b16 %v162
    %v562 = vunpack.c.h.b16 %v162
    %v563 = vunpack.c.l.b16 %v163
    %v564 = vunpack.c.h.b16 %v163
    %v565 = vunpack.c.l.b16 %v164
    %v566 = vunpack.c.h.b16 %v164
    %v567 = vunpack.c.l.b16 %v165
    %v568 = vunpack.c.h.b16 %v165
    %v569 = vunpack.c.l.b16 %v166
    %v570 = vunpack.c.h.b16 %v166
    %v571 = vunpack.c.l.b16 %v167
    %v572 = vunpack.c.h.b16 %v167
    %v573 = vunpack.c.l.b16 %v168
    %v574 = vunpack.c.h.b16 %v168
    %v575 = vunpack.c.l.b16 %v169
    %v576 = vunpack.c.h.b16 %v169
    %v577 = vunpack.c.l.b16 %v170
    %v578 = vunpack.c.h.b16 %v170
    %v579 = vunpack.c.l.b16 %v171
    %v580 = vunpack.c.h.b16 %v171
    %v581 = vunpack.c.l.b16 %v172
    %v582 = vunpack.c.h.b16 %v172
    %v583 = vunpack.c.l.b16 %v173
    %v584 = vunpack.c.h.b16 %v173
    %v585 = vunpack.c.l.b16 %v174
    %v586 = vunpack.c.h.b16 %v174
    %v587 = vunpack.c.l.b16 %v175
    %v588 = vunpack.c.h.b16 %v175
    %v589 = vunpack.c.l.b16 %v176
    %v590 = vunpack.c.h.b16 %v176
    %v591 = vunpack.c.l.b16 %v177
    %v592 = vunpack.c.h.b16 %v177
    %v593 = vunpack.c.l.b16 %v178
    %v594 = vunpack.c.h.b16 %v178
    %v595 = vunpack.c.l.b16 %v179
    %v596 = vunpack.c.h.b16 %v179
    %v597 = vunpack.c.l.b16 %v180
    %v598 = vunpack.c.h.b16 %v180
    %v599 = vunpack.c.l.b16 %v181
    %v600 = vunpack.c.h.b16 %v181
    %v601 = vunpack.c.l.b16 %v182
    %v602 = vunpack.c.h.b16 %v182
    %v603 = vunpack.c.l.b16 %v183
    %v604 = vunpack.c.h.b16 %v183
    %v605 = vunpack.c.l.b16 %v184
    %v606 = vunpack.c.h.b16 %v184
    %v607 = vunpack.c.l.b16 %v185
    %v608 = vunpack.c.h.b16 %v185
    %v609 = vunpack.c.l.b16 %v186
    %v610 = vunpack.c.h.b16 %v186
    %v611 = vunpack.c.l.b16 %v187
    %v612 = vunpack.c.h.b16 %v187
    %v613 = vunpack.c.l.b16 %v188
    %v614 = vunpack.c.h.b16 %v188
    %v615 = vunpack.c.l.b16 %v189
    %v616 = vunpack.c.h.b16 %v189
    %v617 = vunpack.c.l.b16 %v190
    %v618 = vunpack.c.h.b16 %v190
    %v619 = vunpack.c.l.b16 %v191
    %v620 = vunpack.c.h.b16 %v191
    %v621 = vunpack.c.l.b16 %v192
    %v622 = vunpack.c.h.b16 %v192
    %v623 = vunpack.c.l.b16 %v193
    %v624 = vunpack.c.h.b16 %v193
    %v625 = vunpack.c.l.b16 %v194
    %v626 = vunpack.c.h.b16 %v194
    %v627 = vunpack.c.l.b16 %v195
    %v628 = vunpack.c.h.b16 %v195
    %v629 = vunpack.c.l.b16 %v196
    %v630 = vunpack.c.h.b16 %v196
    %v631 = vunpack.c.l.b16 %v197
    %v632 = vunpack.c.h.b16 %v197
    %v633 = vunpack.c.l.b16 %v198
    %v634 = vunpack.c.h.b16 %v198
    %v635 = vpack.c.b16 %v381, %v379
    %v636 = vpack.c.b16 %v382, %v380
    %v637 = vpack.c.b16 %v385, %v383
    %v638 = vpack.c.b16 %v386, %v384
    %v639 = vpack.c.b16 %v389, %v387
    %v640 = vpack.c.b16 %v390, %v388
    %v641 = vpack.c.b16 %v393, %v391
    %v642 = vpack.c.b16 %v394, %v392
    %v643 = vpack.c.b16 %v397, %v395
    %v644 = vpack.c.b16 %v398, %v396
    %v645 = vpack.c.b16 %v401, %v399
    %v646 = vpack.c.b16 %v402, %v400
    %v647 = vpack.c.b16 %v405, %v403
    %v648 = vpack.c.b16 %v406, %v404
    %v649 = vpack.c.b16 %v409, %v407
    %v650 = vpack.c.b16 %v410, %v408
    %v651 = vpack.c.b16 %v413, %v411
    %v652 = vpack.c.b16 %v414, %v412
    %v653 = vpack.c.b16 %v417, %v415
    %v654 = vpack.c.b16 %v418, %v416
    %v655 = vpack.c.b16 %v421, %v419
    %v656 = vpack.c.b16 %v422, %v420
    %v657 = vpack.c.b16 %v425, %v423
    %v658 = vpack.c.b16 %v426, %v424
    %v659 = vpack.c.b16 %v429, %v427
    %v660 = vpack.c.b16 %v430, %v428
    %v661 = vpack.c.b16 %v433, %v431
    %v662 = vpack.c.b16 %v434, %v432
    %v663 = vpack.c.b16 %v437, %v435
    %v664 = vpack.c.b16 %v438, %v436
    %v665 = vpack.c.b16 %v441, %v439
    %v666 = vpack.c.b16 %v442, %v440
    %v667 = vpack.c.b16 %v445, %v443
    %v668 = vpack.c.b16 %v446, %v444
    %v669 = vpack.c.b16 %v449, %v447
    %v670 = vpack.c.b16 %v450, %v448
    %v671 = vpack.c.b16 %v453, %v451
    %v672 = vpack.c.b16 %v454, %v452
    %v673 = vpack.c.b16 %v457, %v455
    %v674 = vpack.c.b16 %v458, %v456
    %v675 = vpack.c.b16 %v461, %v459
    %v676 = vpack.c.b16 %v462, %v460
    %v677 = vpack.c.b16 %v465, %v463
    %v678 = vpack.c.b16 %v466, %v464
    %v679 = vpack.c.b16 %v469, %v467
    %v680 = vpack.c.b16 %v470, %v468
    %v681 = vpack.c.b16 %v473, %v471
    %v682 = vpack.c.b16 %v474, %v472
    %v683 = vpack.c.b16 %v477, %v475
    %v684 = vpack.c.b16 %v478, %v476
    %v685 = vpack.c.b16 %v481, %v479
    %v686 = vpack.c.b16 %v482, %v480
    %v687 = vpack.c.b16 %v485, %v483
    %v688 = vpack.c.b16 %v486, %v484
    %v689 = vpack.c.b16 %v489, %v487
    %v690 = vpack.c.b16 %v490, %v488
    %v691 = vpack.c.b16 %v493, %v491
    %v692 = vpack.c.b16 %v494, %v492
    %v693 = vpack.c.b16 %v497, %v495
    %v694 = vpack.c.b16 %v498, %v496
    %v695 = vpack.c.b16 %v501, %v499
    %v696 = vpack.c.b16 %v502, %v500
    %v697 = vpack.c.b16 %v505, %v503
    %v698 = vpack.c.b16 %v506, %v504
    %v699 = vpack.c.b16 %v509, %v507
    %v700 = vpack.c.b16 %v510, %v508
    %v701 = vpack.c.b16 %v513, %v511
    %v702 = vpack.c.b16 %v514, %v512
    %v703 = vpack.c.b16 %v517, %v515
    %v704 = vpack.c.b16 %v518, %v516
    %v705 = vpack.c.b16 %v521, %v519
    %v706 = vpack.c.b16 %v522, %v520
    %v707 = vpack.c.b16 %v525, %v523
    %v708 = vpack.c.b16 %v526, %v524
    %v709 = vpack.c.b16 %v529, %v527
    %v710 = vpack.c.b16 %v530, %v528
    %v711 = vpack.c.b16 %v533, %v531
    %v712 = vpack.c.b16 %v534, %v532
    %v713 = vpack.c.b16 %v537, %v535
    %v714 = vpack.c.b16 %v538, %v536
    %v715 = vpack.c.b16 %v541, %v539
    %v716 = vpack.c.b16 %v542, %v540
    %v717 = vpack.c.b16 %v545, %v543
    %v718 = vpack.c.b16 %v546, %v544
    %v719 = vpack.c.b16 %v549, %v547
    %v720 = vpack.c.b16 %v550, %v548
    %v721 = vpack.c.b16 %v553, %v551
    %v722 = vpack.c.b16 %v554, %v552
    %v723 = vpack.c.b16 %v557, %v555
    %v724 = vpack.c.b16 %v558, %v556
    %v725 = vpack.c.b16 %v561, %v559
    %v726 = vpack.c.b16 %v562, %v560
    %v727 = vpack.c.b16 %v565, %v563
    %v728 = vpack.c.b16 %v566, %v564
    %v729 = vpack.c.b16 %v569, %v567
    %v730 = vpack.c.b16 %v570, %v568
    %v731 = vpack.c.b16 %v573, %v571
    %v732 = vpack.c.b16 %v574, %v572
    %v733 = vpack.c.b16 %v577, %v575
    %v734 = vpack.c.b16 %v578, %v576
    %v735 = vpack.c.b16 %v581, %v579
    %v736 = vpack.c.b16 %v582, %v580
    %v737 = vpack.c.b16 %v585, %v583
    %v738 = vpack.c.b16 %v586, %v584
    %v739 = vpack.c.b16 %v589, %v587
    %v740 = vpack.c.b16 %v590, %v588
    %v741 = vpack.c.b16 %v593, %v591
    %v742 = vpack.c.b16 %v594, %v592
    %v743 = vpack.c.b16 %v597, %v595
    %v744 = vpack.c.b16 %v598, %v596
    %v745 = vpack.c.b16 %v601, %v599
    %v746 = vpack.c.b16 %v602, %v600
    %v747 = vpack.c.b16 %v605, %v603
    %v748 = vpack.c.b16 %v606, %v604
    %v749 = vpack.c.b16 %v609, %v607
    %v750 = vpack.c.b16 %v610, %v608
    %v751 = vpack.c.b16 %v613, %v611
    %v752 = vpack.c.b16 %v614, %v612
    %v753 = vpack.c.b16 %v617, %v615
    %v754 = vpack.c.b16 %v618, %v616
    %v755 = vpack.c.b16 %v621, %v619
    %v756 = vpack.c.b16 %v622, %v620
    %v757 = vpack.c.b16 %v625, %v623
    %v758 = vpack.c.b16 %v626, %v624
    %v759 = vpack.c.b16 %v629, %v627
    %v760 = vpack.c.b16 %v630, %v628
    %v761 = vpack.c.b16 %v633, %v631
    %v762 = vpack.c.b16 %v634, %v632
    %891 = vmatprep.subr.bf16.mxu0 %v650
    %892 = vmatpush1.bf16.msra.mxu0 %v649
    %893 = vmatprep.subr.bf16.mxu0 %v648
    %894 = vmatpush1.bf16.msra.mxu0 %v647
    %895 = vmatprep.subr.bf16.mxu0 %v646
    %896 = vmatpush1.bf16.msra.mxu0 %v645
    %897 = vmatprep.subr.bf16.mxu0 %v644
    %898 = vmatpush1.bf16.msra.mxu0 %v643
    %899 = vmatprep.subr.bf16.mxu0 %v642
    %900 = vmatpush1.bf16.msra.mxu0 %v641
    %901 = vmatprep.subr.bf16.mxu0 %v640
    %902 = vmatpush1.bf16.msra.mxu0 %v639
    %903 = vmatprep.subr.bf16.mxu0 %v638
    %904 = vmatpush1.bf16.msra.mxu0 %v637
    %905 = vmatprep.subr.bf16.mxu0 %v636
    %906 = vmatpush1.bf16.msra.mxu0 %v635
    %907 = vmatprep.subr.bf16.mxu0 %v666
    %908 = vmatpush2.bf16.msra.mxu0 %v665
    %909 = vmatprep.subr.bf16.mxu0 %v664
    %910 = vmatpush2.bf16.msra.mxu0 %v663
    %911 = vmatprep.subr.bf16.mxu0 %v662
    %912 = vmatpush2.bf16.msra.mxu0 %v661
    %913 = vmatprep.subr.bf16.mxu0 %v660
    %914 = vmatpush2.bf16.msra.mxu0 %v659
    %915 = vmatprep.subr.bf16.mxu0 %v658
    %916 = vmatpush2.bf16.msra.mxu0 %v657
    %917 = vmatprep.subr.bf16.mxu0 %v656
    %918 = vmatpush2.bf16.msra.mxu0 %v655
    %919 = vmatprep.subr.bf16.mxu0 %v654
    %920 = vmatpush2.bf16.msra.mxu0 %v653
    %921 = vmatprep.subr.bf16.mxu0 %v652
    %922 = vmatpush2.bf16.msra.mxu0 %v651
    %923 = vmatprep.mubr.bf16.mxu0 %v236
    %924 = vmatmul.mubr.bf16.gmra.mxu0 %v235
    %v925 = vpop.f32.mrf.mxu0
    %v926 = vadd.f32 %v204, %v925
    %v927 = vpop.f32.mrf.mxu0
    %v928 = vadd.f32 %v208, %v927
    %v929 = vpop.f32.mrf.mxu0
    %v930 = vadd.f32 %v204, %v929
    %v931 = vpop.f32.mrf.mxu0
    %v932 = vadd.f32 %v208, %v931
    %933 = vdwg.mxu0
    %934 = vmatprep.subr.bf16.mxu0 %v682
    %935 = vmatpush1.bf16.msra.mxu0 %v681
    %936 = vmatprep.subr.bf16.mxu0 %v680
    %937 = vmatpush1.bf16.msra.mxu0 %v679
    %938 = vmatprep.subr.bf16.mxu0 %v678
    %939 = vmatpush1.bf16.msra.mxu0 %v677
    %940 = vmatprep.subr.bf16.mxu0 %v676
    %941 = vmatpush1.bf16.msra.mxu0 %v675
    %942 = vmatprep.subr.bf16.mxu0 %v674
    %943 = vmatpush1.bf16.msra.mxu0 %v673
    %944 = vmatprep.subr.bf16.mxu0 %v672
    %945 = vmatpush1.bf16.msra.mxu0 %v671
    %946 = vmatprep.subr.bf16.mxu0 %v670
    %947 = vmatpush1.bf16.msra.mxu0 %v669
    %948 = vmatprep.subr.bf16.mxu0 %v668
    %949 = vmatpush1.bf16.msra.mxu0 %v667
    %950 = vmatprep.subr.bf16.mxu0 %v698
    %951 = vmatpush2.bf16.msra.mxu0 %v697
    %952 = vmatprep.subr.bf16.mxu0 %v696
    %953 = vmatpush2.bf16.msra.mxu0 %v695
    %954 = vmatprep.subr.bf16.mxu0 %v694
    %955 = vmatpush2.bf16.msra.mxu0 %v693
    %956 = vmatprep.subr.bf16.mxu0 %v692
    %957 = vmatpush2.bf16.msra.mxu0 %v691
    %958 = vmatprep.subr.bf16.mxu0 %v690
    %959 = vmatpush2.bf16.msra.mxu0 %v689
    %960 = vmatprep.subr.bf16.mxu0 %v688
    %961 = vmatpush2.bf16.msra.mxu0 %v687
    %962 = vmatprep.subr.bf16.mxu0 %v686
    %963 = vmatpush2.bf16.msra.mxu0 %v685
    %964 = vmatprep.subr.bf16.mxu0 %v684
    %965 = vmatpush2.bf16.msra.mxu0 %v683
    %966 = vmatprep.mubr.bf16.mxu0 %v238
    %967 = vmatmul.mubr.bf16.gmra.mxu0 %v237
    %v968 = vpop.f32.mrf.mxu0
    %v969 = vadd.f32 %v926, %v968
    %v970 = vpop.f32.mrf.mxu0
    %v971 = vadd.f32 %v928, %v970
    %v972 = vpop.f32.mrf.mxu0
    %v973 = vadd.f32 %v930, %v972
    %v974 = vpop.f32.mrf.mxu0
    %v975 = vadd.f32 %v932, %v974
    %976 = vdwg.mxu0
    %977 = vmatprep.subr.bf16.mxu0 %v714
    %978 = vmatpush1.bf16.msra.mxu0 %v713
    %979 = vmatprep.subr.bf16.mxu0 %v712
    %980 = vmatpush1.bf16.msra.mxu0 %v711
    %981 = vmatprep.subr.bf16.mxu0 %v710
    %982 = vmatpush1.bf16.msra.mxu0 %v709
    %983 = vmatprep.subr.bf16.mxu0 %v708
    %984 = vmatpush1.bf16.msra.mxu0 %v707
    %985 = vmatprep.subr.bf16.mxu0 %v706
    %986 = vmatpush1.bf16.msra.mxu0 %v705
    %987 = vmatprep.subr.bf16.mxu0 %v704
    %988 = vmatpush1.bf16.msra.mxu0 %v703
    %989 = vmatprep.subr.bf16.mxu0 %v702
    %990 = vmatpush1.bf16.msra.mxu0 %v701
    %991 = vmatprep.subr.bf16.mxu0 %v700
    %992 = vmatpush1.bf16.msra.mxu0 %v699
    %993 = vmatprep.subr.bf16.mxu0 %v730
    %994 = vmatpush2.bf16.msra.mxu0 %v729
    %995 = vmatprep.subr.bf16.mxu0 %v728
    %996 = vmatpush2.bf16.msra.mxu0 %v727
    %997 = vmatprep.subr.bf16.mxu0 %v726
    %998 = vmatpush2.bf16.msra.mxu0 %v725
    %999 = vmatprep.subr.bf16.mxu0 %v724
    %1000 = vmatpush2.bf16.msra.mxu0 %v723
    %1001 = vmatprep.subr.bf16.mxu0 %v722
    %1002 = vmatpush2.bf16.msra.mxu0 %v721
    %1003 = vmatprep.subr.bf16.mxu0 %v720
    %1004 = vmatpush2.bf16.msra.mxu0 %v719
    %1005 = vmatprep.subr.bf16.mxu0 %v718
    %1006 = vmatpush2.bf16.msra.mxu0 %v717
    %1007 = vmatprep.subr.bf16.mxu0 %v716
    %1008 = vmatpush2.bf16.msra.mxu0 %v715
    %1009 = vmatprep.mubr.bf16.mxu0 %v240
    %1010 = vmatmul.mubr.bf16.gmra.mxu0 %v239
    %v1011 = vpop.f32.mrf.mxu0
    %v1012 = vadd.f32 %v969, %v1011
    %v1013 = vpop.f32.mrf.mxu0
    %v1014 = vadd.f32 %v971, %v1013
    %v1015 = vpop.f32.mrf.mxu0
    %v1016 = vadd.f32 %v973, %v1015
    %v1017 = vpop.f32.mrf.mxu0
    %v1018 = vadd.f32 %v975, %v1017
    %1019 = vdwg.mxu0
    %1020 = vmatprep.subr.bf16.mxu0 %v746
    %1021 = vmatpush1.bf16.msra.mxu0 %v745
    %1022 = vmatprep.subr.bf16.mxu0 %v744
    %1023 = vmatpush1.bf16.msra.mxu0 %v743
    %1024 = vmatprep.subr.bf16.mxu0 %v742
    %1025 = vmatpush1.bf16.msra.mxu0 %v741
    %1026 = vmatprep.subr.bf16.mxu0 %v740
    %1027 = vmatpush1.bf16.msra.mxu0 %v739
    %1028 = vmatprep.subr.bf16.mxu0 %v738
    %1029 = vmatpush1.bf16.msra.mxu0 %v737
    %1030 = vmatprep.subr.bf16.mxu0 %v736
    %1031 = vmatpush1.bf16.msra.mxu0 %v735
    %1032 = vmatprep.subr.bf16.mxu0 %v734
    %1033 = vmatpush1.bf16.msra.mxu0 %v733
    %1034 = vmatprep.subr.bf16.mxu0 %v732
    %1035 = vmatpush1.bf16.msra.mxu0 %v731
    %1036 = vmatprep.subr.bf16.mxu0 %v762
    %1037 = vmatpush2.bf16.msra.mxu0 %v761
    %1038 = vmatprep.subr.bf16.mxu0 %v760
    %1039 = vmatpush2.bf16.msra.mxu0 %v759
    %1040 = vmatprep.subr.bf16.mxu0 %v758
    %1041 = vmatpush2.bf16.msra.mxu0 %v757
    %1042 = vmatprep.subr.bf16.mxu0 %v756
    %1043 = vmatpush2.bf16.msra.mxu0 %v755
    %1044 = vmatprep.subr.bf16.mxu0 %v754
    %1045 = vmatpush2.bf16.msra.mxu0 %v753
    %1046 = vmatprep.subr.bf16.mxu0 %v752
    %1047 = vmatpush2.bf16.msra.mxu0 %v751
    %1048 = vmatprep.subr.bf16.mxu0 %v750
    %1049 = vmatpush2.bf16.msra.mxu0 %v749
    %1050 = vmatprep.subr.bf16.mxu0 %v748
    %1051 = vmatpush2.bf16.msra.mxu0 %v747
    %1052 = vmatprep.mubr.bf16.mxu0 %v242
    %1053 = vmatmul.mubr.bf16.gmra.mxu0 %v241
    %v1054 = vpop.f32.mrf.mxu0
    %v1055 = vadd.f32 %v1012, %v1054
    %v1056 = vpop.f32.mrf.mxu0
    %v1057 = vadd.f32 %v1014, %v1056
    %v1058 = vpop.f32.mrf.mxu0
    %v1059 = vadd.f32 %v1016, %v1058
    %v1060 = vpop.f32.mrf.mxu0
    %v1061 = vadd.f32 %v1018, %v1060
    %1062 = vdwg.mxu0
    %v1063 = vmax.f32 %v1055, 0.0
    %v1064 = vmax.f32 %v1057, 0.0
    %v1065 = vmax.f32 %v1059, 0.0
    %v1066 = vmax.f32 %v1061, 0.0
    %v1067 = vpack.c.bf16 %v1065, %v1063
    %v1068 = vpack.c.bf16 %v1066, %v1064
    %v1069 = vld [vmem:[#allocation7] sm:$0xf]
    %v1070 = vld [vmem:[#allocation7 + $0x4] sm:$0xf]
    %v1071 = vld [vmem:[#allocation7 + $0x8] sm:$0xf]
    %v1072 = vld [vmem:[#allocation7 + $0xc] sm:$0xf]
    %v1073 = vld [vmem:[#allocation7 + $0x10] sm:$0xf]
    %v1074 = vld [vmem:[#allocation7 + $0x14] sm:$0xf]
    %v1075 = vld [vmem:[#allocation7 + $0x18] sm:$0xf]
    %v1076 = vld [vmem:[#allocation7 + $0x1c] sm:$0xf]
    %v1077 = vld [vmem:[#allocation7 + $0x20] sm:$0xf]
    %v1078 = vld [vmem:[#allocation7 + $0x24] sm:$0xf]
    %v1079 = vld [vmem:[#allocation7 + $0x28] sm:$0xf]
    %v1080 = vld [vmem:[#allocation7 + $0x2c] sm:$0xf]
    %v1081 = vld [vmem:[#allocation7 + $0x30] sm:$0xf]
    %v1082 = vld [vmem:[#allocation7 + $0x34] sm:$0xf]
    %v1083 = vld [vmem:[#allocation7 + $0x38] sm:$0xf]
    %v1084 = vld [vmem:[#allocation7 + $0x3c] sm:$0xf]
    %v1085 = vld [vmem:[#allocation7 + $0x40] sm:$0xf]
    %v1086 = vld [vmem:[#allocation7 + $0x44] sm:$0xf]
    %v1087 = vld [vmem:[#allocation7 + $0x48] sm:$0xf]
    %v1088 = vld [vmem:[#allocation7 + $0x4c] sm:$0xf]
    %v1089 = vld [vmem:[#allocation7 + $0x50] sm:$0xf]
    %v1090 = vld [vmem:[#allocation7 + $0x54] sm:$0xf]
    %v1091 = vld [vmem:[#allocation7 + $0x58] sm:$0xf]
    %v1092 = vld [vmem:[#allocation7 + $0x5c] sm:$0xf]
    %v1093 = vld [vmem:[#allocation7 + $0x60] sm:$0xf]
    %v1094 = vld [vmem:[#allocation7 + $0x64] sm:$0xf]
    %v1095 = vld [vmem:[#allocation7 + $0x68] sm:$0xf]
    %v1096 = vld [vmem:[#allocation7 + $0x6c] sm:$0xf]
    %v1097 = vld [vmem:[#allocation7 + $0x70] sm:$0xf]
    %v1098 = vld [vmem:[#allocation7 + $0x74] sm:$0xf]
    %v1099 = vld [vmem:[#allocation7 + $0x78] sm:$0xf]
    %v1100 = vld [vmem:[#allocation7 + $0x7c] sm:$0xf]
    %v1101 = vld [vmem:[%s4] sm:$0x1]
    %v1103 = vlaneseq
    %v1104 = vshrl.u32 %v1103, 7
    %v1105 = vsub.s32 0, %v1104
    %v1106 = vrot.slane %v1101, %v1105
    %v1140 = vunpack.c.l.b16 %v1069
    %v1141 = vunpack.c.l.b16 %v1070
    %v1142 = vunpack.c.l.b16 %v1071
    %v1143 = vunpack.c.l.b16 %v1072
    %v1144 = vunpack.c.l.b16 %v1073
    %v1145 = vunpack.c.l.b16 %v1074
    %v1146 = vunpack.c.l.b16 %v1075
    %v1147 = vunpack.c.l.b16 %v1076
    %v1148 = vunpack.c.l.b16 %v1077
    %v1149 = vunpack.c.l.b16 %v1078
    %v1150 = vunpack.c.l.b16 %v1079
    %v1151 = vunpack.c.l.b16 %v1080
    %v1152 = vunpack.c.l.b16 %v1081
    %v1153 = vunpack.c.l.b16 %v1082
    %v1154 = vunpack.c.l.b16 %v1083
    %v1155 = vunpack.c.l.b16 %v1084
    %v1156 = vunpack.c.l.b16 %v1085
    %v1157 = vunpack.c.l.b16 %v1086
    %v1158 = vunpack.c.l.b16 %v1087
    %v1159 = vunpack.c.l.b16 %v1088
    %v1160 = vunpack.c.l.b16 %v1089
    %v1161 = vunpack.c.l.b16 %v1090
    %v1162 = vunpack.c.l.b16 %v1091
    %v1163 = vunpack.c.l.b16 %v1092
    %v1164 = vunpack.c.l.b16 %v1093
    %v1165 = vunpack.c.l.b16 %v1094
    %v1166 = vunpack.c.l.b16 %v1095
    %v1167 = vunpack.c.l.b16 %v1096
    %v1168 = vunpack.c.l.b16 %v1097
    %v1169 = vunpack.c.l.b16 %v1098
    %v1170 = vunpack.c.l.b16 %v1099
    %v1171 = vunpack.c.l.b16 %v1100
    %v1172 = vpack.c.b16 %v1141, %v1140
    %v1173 = vpack.c.b16 %v1143, %v1142
    %v1174 = vpack.c.b16 %v1145, %v1144
    %v1175 = vpack.c.b16 %v1147, %v1146
    %v1176 = vpack.c.b16 %v1149, %v1148
    %v1177 = vpack.c.b16 %v1151, %v1150
    %v1178 = vpack.c.b16 %v1153, %v1152
    %v1179 = vpack.c.b16 %v1155, %v1154
    %v1180 = vpack.c.b16 %v1157, %v1156
    %v1181 = vpack.c.b16 %v1159, %v1158
    %v1182 = vpack.c.b16 %v1161, %v1160
    %v1183 = vpack.c.b16 %v1163, %v1162
    %v1184 = vpack.c.b16 %v1165, %v1164
    %v1185 = vpack.c.b16 %v1167, %v1166
    %v1186 = vpack.c.b16 %v1169, %v1168
    %v1187 = vpack.c.b16 %v1171, %v1170
    %1204 = vmatprep.subr.bf16.mxu0 0
    %1205 = vmatpush1.bf16.msra.mxu0 %v1179
    %1206 = vmatprep.subr.bf16.mxu0 0
    %1207 = vmatpush1.bf16.msra.mxu0 %v1178
    %1208 = vmatprep.subr.bf16.mxu0 0
    %1209 = vmatpush1.bf16.msra.mxu0 %v1177
    %1210 = vmatprep.subr.bf16.mxu0 0
    %1211 = vmatpush1.bf16.msra.mxu0 %v1176
    %1212 = vmatprep.subr.bf16.mxu0 0
    %1213 = vmatpush1.bf16.msra.mxu0 %v1175
    %1214 = vmatprep.subr.bf16.mxu0 0
    %1215 = vmatpush1.bf16.msra.mxu0 %v1174
    %1216 = vmatprep.subr.bf16.mxu0 0
    %1217 = vmatpush1.bf16.msra.mxu0 %v1173
    %1218 = vmatprep.subr.bf16.mxu0 0
    %1219 = vmatpush1.bf16.msra.mxu0 %v1172
    %1220 = vmatprep.subr.bf16.mxu0 0
    %1221 = vmatpush2.bf16.msra.mxu0 %v1187
    %1222 = vmatprep.subr.bf16.mxu0 0
    %1223 = vmatpush2.bf16.msra.mxu0 %v1186
    %1224 = vmatprep.subr.bf16.mxu0 0
    %1225 = vmatpush2.bf16.msra.mxu0 %v1185
    %1226 = vmatprep.subr.bf16.mxu0 0
    %1227 = vmatpush2.bf16.msra.mxu0 %v1184
    %1228 = vmatprep.subr.bf16.mxu0 0
    %1229 = vmatpush2.bf16.msra.mxu0 %v1183
    %1230 = vmatprep.subr.bf16.mxu0 0
    %1231 = vmatpush2.bf16.msra.mxu0 %v1182
    %1232 = vmatprep.subr.bf16.mxu0 0
    %1233 = vmatpush2.bf16.msra.mxu0 %v1181
    %1234 = vmatprep.subr.bf16.mxu0 0
    %1235 = vmatpush2.bf16.msra.mxu0 %v1180
    %1236 = vmatprep.mubr.bf16.mxu0 %v1068
    %1237 = vmatmul.mubr.bf16.gmra.mxu0 %v1067
    %v1238 = vpop.f32.mrf.mxu0
    %v1239 = vadd.f32 %v1106, %v1238
    %v1240 = vpop.f32.mrf.mxu0
    %v1241 = vpop.f32.mrf.mxu0
    %v1242 = vadd.f32 %v1106, %v1241
    %v1243 = vpop.f32.mrf.mxu0
    %1244 = vdwg.mxu0
    %1245 = vst [vmem:[#allocation8] sm:$0xff] %v1239
    %1246 = vst [vmem:[#allocation8 + $0x8] sm:$0xff] %v1242
    // Predicated region
    $region34: #{tpu_custom_call.1} parent=1 // pred_check
      _
    $region35: #{tpu_custom_call.1} parent=1 // pred_check_branch
      %1248 = sbr.rel (0) target = $region37
    $region36: #{tpu_custom_call.1} parent=1 // pred_region
      %s1250 = ssub.s32 256, 256
      %1251 = vsyncadd [#allocation4], %s1250
      %s1252 = sshll.u32 [#allocation8], 4
      %s1253 = int_to_ptr.vmem [resolvable:$true] %s1252
      %1258 = dma.vmem_to_hbm [thread:$0]  %s1253, 256, %s5, [#allocation4], 128, 128, 8
    $region37: #{tpu_custom_call.1} parent=1 // pred_fallthru
      _
    // Predicated region
    $region38: #{tpu_custom_call.1} parent=1 // pred_check
      _
    $region39: #{tpu_custom_call.1} parent=1 // pred_check_branch
      %1260 = sbr.rel (0) target = $region41
    $region40: #{tpu_custom_call.1} parent=1 // pred_region
      %1261 = dma.done [#allocation4], 256
    $region41: #{tpu_custom_call.1} parent=1 // pred_fallthru
      _
    %1262 = vsyncpa [#allocation3], 1
    %1263 = vsyncpa [#allocation6], 1
    %1264 = vsyncpa [#allocation4], 1

</llo_original>
